<compile_context>
chip_gen: v6e
topology: v6e:2x2x1
jax: 0.10.0
libtpu: 0.0.40
codegen_flags: <defaults>
</compile_context>

<pallas_src>
import functools

import jax
import jax.numpy as jnp
from jax.experimental import pallas as pl
from jax.experimental.pallas import tpu as pltpu


def _round_up(x, m):
    return (x + m - 1) // m * m


def _cdiv(a, b):
    return -(-a // b)


def _disc_kernel(x_ref, w1_ref, b1_ref, w2_ref, b2_ref, w3_ref, b3_ref, out_ref,
                 *, reward):
    # fc1 / fc2: bf16 operands on the MXU, f32 accumulation; tanh/bias in f32.
    x = x_ref[...].astype(jnp.bfloat16)
    h1 = jnp.tanh(
        jnp.dot(x, w1_ref[...], preferred_element_type=jnp.float32) + b1_ref[...]
    )
    h2 = jnp.tanh(
        jnp.dot(h1.astype(jnp.bfloat16), w2_ref[...],
                preferred_element_type=jnp.float32) + b2_ref[...]
    )
    # fc3: single real output column -> VPU multiply + XLU lane reduce.
    logits = jnp.sum(h2 * w3_ref[...], axis=-1, keepdims=True) + b3_ref[...]
    if reward:
        # expert reward: -log(sigmoid(logits)) == softplus(-logits), stable form.
        out_ref[...] = (jnp.maximum(-logits, 0.0)
                        + jnp.log(1.0 + jnp.exp(-jnp.abs(logits))))
    else:
        out_ref[...] = jax.nn.sigmoid(logits)


def prepare_discriminator_params(params):
    """One-time packing of fc1/fc2/fc3 into a TPU-friendly layout.

    Call once after init (and after each optimizer update).
      w1: (d_in, 400) -> (d_in, 512)  bf16   (input dim left unpadded)
      w2: (400, 300)  -> (512, 384)   bf16
      w3: (300, 1)    -> (1, 384)     f32 row (for the lane-reduce fc3)
      b1/b2 -> (1, padded) f32 rows, b3 -> (1, 1) f32
    """
    w1, b1, w2, b2, w3, b3 = (
        params["w1"], params["b1"], params["w2"],
        params["b2"], params["w3"], params["b3"],
    )
    d_in, h1 = w1.shape
    h2 = w2.shape[1]
    h1_p = _round_up(h1, 128)   # 512
    h2_p = _round_up(h2, 128)   # 384

    return {
        "w1": jnp.zeros((d_in, h1_p), jnp.float32).at[:, :h1].set(w1)
              .astype(jnp.bfloat16),
        "b1": jnp.zeros((1, h1_p), jnp.float32).at[0, :h1].set(b1),
        "w2": jnp.zeros((h1_p, h2_p), jnp.float32).at[:h1, :h2].set(w2)
              .astype(jnp.bfloat16),
        "b2": jnp.zeros((1, h2_p), jnp.float32).at[0, :h2].set(b2),
        "w3": jnp.zeros((1, h2_p), jnp.float32).at[0, :h2].set(w3[:, 0]),
        "b3": jnp.reshape(b3, (1, 1)).astype(jnp.float32),
    }


def _disc_call(state_action, p, *, reward):
    w1, b1, w2, b2, w3, b3 = (p["w1"], p["b1"], p["w2"], p["b2"], p["w3"], p["b3"])
    B, d_in = state_action.shape
    h1_p = w1.shape[1]
    h2_p = w2.shape[1]

    # Sublane-align the batch (tiny pad; only triggers when B % 8 != 0).
    B8 = _round_up(B, 8)
    x = state_action if B8 == B else jnp.pad(state_action, ((0, B8 - B), (0, 0)))

    # Balanced batch tiles: <= ~1024 rows each, >= 2 tiles once the batch is
    # big enough so the "parallel" axis can use both TensorCores on v7x.
    n_tiles = max(_cdiv(B8, 1024), 2 if B8 >= 512 else 1)
    tile_b = _round_up(_cdiv(B8, n_tiles), 8)
    grid = _cdiv(B8, tile_b)   # last tile may be ragged; OOB rows masked on store

    kernel = functools.partial(_disc_kernel, reward=reward)
    const = lambda shape: pl.BlockSpec(shape, lambda i: (0, 0))

    out = pl.pallas_call(
        kernel,
        out_shape=jax.ShapeDtypeStruct((B8, 1), jnp.float32),
        grid_spec=pltpu.PrefetchScalarGridSpec(
            num_scalar_prefetch=0,
            grid=(grid,),
            in_specs=[
                # x tiled over batch; last dim == full d_in (no lane pre-pad in HBM).
                pl.BlockSpec((tile_b, d_in), lambda i: (i, 0)),
                const((d_in, h1_p)),   # weights/biases: constant block index ->
                const((1, h1_p)),      # DMA'd once, VMEM-resident for all steps.
                const((h1_p, h2_p)),
                const((1, h2_p)),
                const((1, h2_p)),
                const((1, 1)),
            ],
            out_specs=pl.BlockSpec((tile_b, 1), lambda i: (i, 0)),
        ),
        compiler_params=pltpu.CompilerParams(
            dimension_semantics=("parallel",),   # batch tiles shard across TCs on v7x
        ),
    )(x, w1, b1, w2, b2, w3, b3)

    return out[:B]


@jax.jit
def discriminator_forward(state_action, padded_params):
    """state_action: (B, state_dim+action_dim) float32. Returns (B, 1) probabilities."""
    return _disc_call(state_action, padded_params, reward=False)


@jax.jit
def expert_reward(state_action, padded_params):
    """GAIL expert reward -log(D(s,a)), fused in-kernel as softplus(-logits)."""
    return _disc_call(state_action, padded_params, reward=True)


def init_discriminator_params(key, state_dim, action_dim):
    """Deterministic init matching nn.Linear default (uniform +/- 1/sqrt(fan_in))."""
    d_in = state_dim + action_dim
    dims = [(d_in, 400), (400, 300), (300, 1)]
    params = {}
    keys = jax.random.split(key, 2 * len(dims))
    for i, (fi, fo) in enumerate(dims):
        bound = 1.0 / jnp.sqrt(fi)
        params[f"w{i+1}"] = jax.random.uniform(
            keys[2 * i], (fi, fo), jnp.float32, -bound, bound
        )
        params[f"b{i+1}"] = jax.random.uniform(
            keys[2 * i + 1], (fo,), jnp.float32, -bound, bound
        )
    return params


def _reference(x, p):
    h1 = jnp.tanh(x @ p["w1"] + p["b1"])
    h2 = jnp.tanh(h1 @ p["w2"] + p["b2"])
    return jax.nn.sigmoid(h2 @ p["w3"] + p["b3"])


# TODO(synk): Adam optimizer / BCE-with-logits loss from the PyTorch module are
# training-side and not part of the forward pass; not implemented as kernels.

if __name__ == "__main__":
    key = jax.random.PRNGKey(0)
    k_param, k_x = jax.random.split(key)

    state_dim, action_dim, batch = 16, 8, 8
    raw_params = init_discriminator_params(k_param, state_dim, action_dim)
    params = prepare_discriminator_params(raw_params)   # one-time pack/pad/bf16

    # Small-batch (single tile) check. bf16 MXU operands -> loosened tolerance.
    x_small = jax.random.normal(k_x, (batch, state_dim + action_dim), jnp.float32)
    prob = discriminator_forward(x_small, params)
    jax.block_until_ready(prob)
    ref = _reference(x_small, raw_params)
    assert prob.shape == (batch, 1)
    assert jnp.allclose(prob, ref, atol=2.5e-2, rtol=2.5e-2)

    # Fused expert reward check.
    rew = expert_reward(x_small, params)
    jax.block_until_ready(rew)
    ref_rew = -jnp.log(ref)
    assert rew.shape == (batch, 1)
    assert jnp.allclose(rew, ref_rew, atol=5e-2, rtol=5e-2)

    # Larger batch: multi-tile grid + ragged last tile path.
    big_batch = 1000
    x_big = jax.random.normal(
        jax.random.PRNGKey(1), (big_batch, state_dim + action_dim), jnp.float32
    )
    prob_big = discriminator_forward(x_big, params)
    jax.block_until_ready(prob_big)
    ref_big = _reference(x_big, raw_params)
    assert prob_big.shape == (big_batch, 1)
    assert jnp.allclose(prob_big, ref_big, atol=2.5e-2, rtol=2.5e-2)

    print("KERNEL_OK")
</pallas_src>

<mosaic_0001>
module attributes {stable_mosaic.version = 11 : i64} {
  func.func @_disc_kernel(%arg0: i32, %arg1: memref<8x24xf32, #tpu.memory_space<vmem>>, %arg2: memref<24x512xbf16, #tpu.memory_space<vmem>>, %arg3: memref<1x512xf32, #tpu.memory_space<vmem>>, %arg4: memref<512x384xbf16, #tpu.memory_space<vmem>>, %arg5: memref<1x384xf32, #tpu.memory_space<vmem>>, %arg6: memref<1x384xf32, #tpu.memory_space<vmem>>, %arg7: memref<1x1xf32, #tpu.memory_space<vmem>>, %arg8: memref<8x1xf32, #tpu.memory_space<vmem>>) attributes {dimension_semantics = [#tpu.dimension_semantics<parallel>], iteration_bounds = array<i64: 1>, scalar_prefetch = 0 : i64, scratch_operands = 0 : i64, tpu.core_type = #tpu.core_type<tc>, window_params = [{transform_indices = @transform_0, window_bounds = array<i64: 8, 24>}, {pipeline_mode = #tpu.pipeline_mode<synchronous>, transform_indices = @transform_1, window_bounds = array<i64: 24, 512>}, {pipeline_mode = #tpu.pipeline_mode<synchronous>, transform_indices = @transform_2, window_bounds = array<i64: 1, 512>}, {pipeline_mode = #tpu.pipeline_mode<synchronous>, transform_indices = @transform_3, window_bounds = array<i64: 512, 384>}, {pipeline_mode = #tpu.pipeline_mode<synchronous>, transform_indices = @transform_4, window_bounds = array<i64: 1, 384>}, {pipeline_mode = #tpu.pipeline_mode<synchronous>, transform_indices = @transform_5, window_bounds = array<i64: 1, 384>}, {pipeline_mode = #tpu.pipeline_mode<synchronous>, transform_indices = @transform_6, window_bounds = array<i64: 1, 1>}, {transform_indices = @transform_7, window_bounds = array<i64: 8, 1>}]} {
    %c0 = arith.constant 0 : index
    %c0_0 = arith.constant 0 : index
    %0 = vector.load %arg1[%c0, %c0_0] : memref<8x24xf32, #tpu.memory_space<vmem>>, vector<8x24xf32>
    %1 = arith.truncf %0 : vector<8x24xf32> to vector<8x24xbf16>
    %c0_1 = arith.constant 0 : index
    %c0_2 = arith.constant 0 : index
    %2 = vector.load %arg2[%c0_1, %c0_2] : memref<24x512xbf16, #tpu.memory_space<vmem>>, vector<24x512xbf16>
    %cst = arith.constant dense<0.000000e+00> : vector<8x512xf32>
    %3 = tpu.matmul %1, %2, %cst {dimension_numbers = #tpu.dot_dimension_numbers<[1], [0], [0], [1], [0, 0, 1, 1], [], []>} : vector<8x24xbf16>, vector<24x512xbf16>, vector<8x512xf32> -> vector<8x512xf32>
    %c0_3 = arith.constant 0 : index
    %c0_4 = arith.constant 0 : index
    %4 = vector.load %arg3[%c0_3, %c0_4] : memref<1x512xf32, #tpu.memory_space<vmem>>, vector<1x512xf32>
    %5 = vector.broadcast %4 : vector<1x512xf32> to vector<8x512xf32>
    %6 = arith.addf %3, %5 : vector<8x512xf32>
    %7 = math.tanh %6 : vector<8x512xf32>
    %8 = arith.truncf %7 : vector<8x512xf32> to vector<8x512xbf16>
    %c0_5 = arith.constant 0 : index
    %c0_6 = arith.constant 0 : index
    %9 = vector.load %arg4[%c0_5, %c0_6] : memref<512x384xbf16, #tpu.memory_space<vmem>>, vector<512x384xbf16>
    %cst_7 = arith.constant dense<0.000000e+00> : vector<8x384xf32>
    %10 = tpu.matmul %8, %9, %cst_7 {dimension_numbers = #tpu.dot_dimension_numbers<[1], [0], [0], [1], [0, 0, 1, 1], [], []>} : vector<8x512xbf16>, vector<512x384xbf16>, vector<8x384xf32> -> vector<8x384xf32>
    %c0_8 = arith.constant 0 : index
    %c0_9 = arith.constant 0 : index
    %11 = vector.load %arg5[%c0_8, %c0_9] : memref<1x384xf32, #tpu.memory_space<vmem>>, vector<1x384xf32>
    %12 = vector.broadcast %11 : vector<1x384xf32> to vector<8x384xf32>
    %13 = arith.addf %10, %12 : vector<8x384xf32>
    %14 = math.tanh %13 : vector<8x384xf32>
    %c0_10 = arith.constant 0 : index
    %c0_11 = arith.constant 0 : index
    %15 = vector.load %arg6[%c0_10, %c0_11] : memref<1x384xf32, #tpu.memory_space<vmem>>, vector<1x384xf32>
    %16 = vector.broadcast %15 : vector<1x384xf32> to vector<8x384xf32>
    %17 = arith.mulf %14, %16 : vector<8x384xf32>
    %cst_12 = arith.constant dense<0.000000e+00> : vector<8xf32>
    %18 = vector.multi_reduction <add>, %17, %cst_12 [1] : vector<8x384xf32> to vector<8xf32>
    %19 = vector.shape_cast %18 : vector<8xf32> to vector<8x1xf32>
    %c0_13 = arith.constant 0 : index
    %c0_14 = arith.constant 0 : index
    %20 = vector.load %arg7[%c0_13, %c0_14] : memref<1x1xf32, #tpu.memory_space<vmem>>, vector<1x1xf32>
    %21 = vector.broadcast %20 : vector<1x1xf32> to vector<8x1xf32>
    %22 = arith.addf %19, %21 : vector<8x1xf32>
    %23 = arith.negf %22 : vector<8x1xf32>
    %24 = math.exp %23 : vector<8x1xf32>
    %cst_15 = arith.constant 1.000000e+00 : f32
    %25 = vector.broadcast %cst_15 : f32 to vector<8x1xf32>
    %26 = arith.addf %25, %24 : vector<8x1xf32>
    %27 = arith.divf %25, %26 : vector<8x1xf32>
    %c0_16 = arith.constant 0 : index
    %c0_17 = arith.constant 0 : index
    %28 = vector.load %arg8[%c0_16, %c0_17] : memref<8x1xf32, #tpu.memory_space<vmem>>, vector<8x1xf32>
    tpu.vector_store %arg8[%c0_16, %c0_17], %27 {strides = array<i32>} : memref<8x1xf32, #tpu.memory_space<vmem>>, vector<8x1xf32>,
    return
  }
  func.func @transform_0(%arg0: i32) -> (i32, i32) {
    %c0_i32 = arith.constant 0 : i32
    %c0_i32_0 = arith.constant 0 : i32
    return %arg0, %c0_i32 : i32, i32
  }
  func.func @transform_1(%arg0: i32) -> (i32, i32) {
    %c0_i32 = arith.constant 0 : i32
    %c0_i32_0 = arith.constant 0 : i32
    %c0_i32_1 = arith.constant 0 : i32
    return %c0_i32, %c0_i32_0 : i32, i32
  }
  func.func @transform_2(%arg0: i32) -> (i32, i32) {
    %c0_i32 = arith.constant 0 : i32
    %c0_i32_0 = arith.constant 0 : i32
    %c0_i32_1 = arith.constant 0 : i32
    return %c0_i32, %c0_i32_0 : i32, i32
  }
  func.func @transform_3(%arg0: i32) -> (i32, i32) {
    %c0_i32 = arith.constant 0 : i32
    %c0_i32_0 = arith.constant 0 : i32
    %c0_i32_1 = arith.constant 0 : i32
    return %c0_i32, %c0_i32_0 : i32, i32
  }
  func.func @transform_4(%arg0: i32) -> (i32, i32) {
    %c0_i32 = arith.constant 0 : i32
    %c0_i32_0 = arith.constant 0 : i32
    %c0_i32_1 = arith.constant 0 : i32
    return %c0_i32, %c0_i32_0 : i32, i32
  }
  func.func @transform_5(%arg0: i32) -> (i32, i32) {
    %c0_i32 = arith.constant 0 : i32
    %c0_i32_0 = arith.constant 0 : i32
    %c0_i32_1 = arith.constant 0 : i32
    return %c0_i32, %c0_i32_0 : i32, i32
  }
  func.func @transform_6(%arg0: i32) -> (i32, i32) {
    %c0_i32 = arith.constant 0 : i32
    %c0_i32_0 = arith.constant 0 : i32
    %c0_i32_1 = arith.constant 0 : i32
    return %c0_i32, %c0_i32_0 : i32, i32
  }
  func.func @transform_7(%arg0: i32) -> (i32, i32) {
    %c0_i32 = arith.constant 0 : i32
    %c0_i32_0 = arith.constant 0 : i32
    return %arg0, %c0_i32 : i32, i32
  }
}

</mosaic_0001>

<llo_original>
// kernel: discriminator_forward.1
$region0: #{discriminator_forward.1}
  #allocation0 [shape = 'u32[]', space=smem, size = 0x4, offset = 0x4, fixed_abs, tag = 'smem constant byte address 0x4 - core index']
  #allocation1 [shape = 'u32[144,128]{1,0:T(1,128)}', space=vmem, size = 0x12000, scoped, tag = 'internal scratch']
  #allocation2 [shape = 'f32[1,1]{1,0:T(1,128)S(1)}', space=vmem, size = 0x200, scoped, tag = 'scoped memory for discriminator_forward.1']
  %s0 = inlined_call_operand.hbm [shape: f32[8,24], index: 0, kind: input, shape index: {}]
  %s1 = inlined_call_operand.hbm [shape: bf16[24,512], index: 1, kind: input, shape index: {}]
  %s2 = inlined_call_operand.hbm [shape: f32[1,512], index: 2, kind: input, shape index: {}]
  %s3 = inlined_call_operand.hbm [shape: bf16[512,384], index: 3, kind: input, shape index: {}]
  %s4 = inlined_call_operand.vmem [shape: f32[1,384], index: 4, kind: input, shape index: {}]
  %s5 = inlined_call_operand.vmem [shape: f32[1,384], index: 5, kind: input, shape index: {}]
  %s6 = inlined_call_operand.<no memory space> [shape: f32[1,1], index: 6, kind: input, shape index: {}]
  %s7 = inlined_call_operand.vmem [shape: f32[8,1], index: 7, kind: output, shape index: {}]
  %s8 = sld [smem:[#allocation0]]
  $region54: #{discriminator_forward.1} parent=0
    _
  %s10 = ssub.s32 1, %s8
  %s11 = scalar_select 0, %s10, %s8
  %v12 = vstv %s6
  %13 = vst [vmem:[#allocation2] sm:$0x1] %v12
  $region1: #{discriminator_forward.1} parent=0
    #allocation3 [shape = 'u8[4096]{0}', space=vmem, size = 0x1000, scoped, tag = 'input window, operand 0, single buffered']
    #allocation4 [shape = 's32[1]{0}', space=sflag, size = 0x4, scoped, tag = 'scoped memory for discriminator_forward.1']
    #allocation5 [shape = 'u8[24576]{0}', space=vmem, size = 0x6000, scoped, tag = 'input window, operand 1, single buffered']
    #allocation6 [shape = 's32[1]{0}', space=sflag, size = 0x4, scoped, tag = 'scoped memory for discriminator_forward.1']
    #allocation7 [shape = 'u8[2048]{0}', space=vmem, size = 0x800, scoped, tag = 'input window, operand 2, single buffered']
    #allocation8 [shape = 'u8[393216]{0}', space=vmem, size = 0x60000, scoped, tag = 'input window, operand 3, single buffered']
    #allocation9 [shape = 's32[1]{0}', space=sflag, size = 0x4, scoped, tag = 'scoped memory for discriminator_forward.1']
    %14 = vsyncpa [#allocation4], 0
    %15 = vsyncpa [#allocation6], 0
    %16 = vsyncpa [#allocation9], 0
    // Predicated region
    $region2: #{discriminator_forward.1} parent=1 // pred_check
      _
    $region3: #{discriminator_forward.1} parent=1 // pred_check_branch
      %18 = sbr.rel (0) target = $region5
    $region4: #{discriminator_forward.1} parent=1 // pred_region
      %s20 = ssub.s32 128, 128
      %21 = vsyncadd [#allocation4], %s20
      %s23 = sshll.u32 [#allocation3], 4
      %s24 = int_to_ptr.vmem [resolvable:$true] %s23
      %26 = dma.hbm_to_vmem [thread:$0]  %s0, 128, %s24, [#allocation4]
    $region5: #{discriminator_forward.1} parent=1 // pred_fallthru
      _
    // Predicated region
    $region6: #{discriminator_forward.1} parent=1 // pred_check
      _
    $region7: #{discriminator_forward.1} parent=1 // pred_check_branch
      %28 = sbr.rel (0) target = $region9
    $region8: #{discriminator_forward.1} parent=1 // pred_region
      %s30 = ssub.s32 768, 768
      %31 = vsyncadd [#allocation6], %s30
      %s32 = sshll.u32 [#allocation5], 4
      %s33 = int_to_ptr.vmem [resolvable:$true] %s32
      %38 = dma.hbm_to_vmem [thread:$0]  %s1, 768, %s33, [#allocation6], 256, 256, 16
    $region9: #{discriminator_forward.1} parent=1 // pred_fallthru
      _
    // Predicated region
    $region10: #{discriminator_forward.1} parent=1 // pred_check
      _
    $region11: #{discriminator_forward.1} parent=1 // pred_check_branch
      %40 = sbr.rel (0) target = $region13
    $region12: #{discriminator_forward.1} parent=1 // pred_region
      %s42 = ssub.s32 64, 64
      %43 = vsyncadd [#allocation6], %s42
      %s45 = sshll.u32 [#allocation7], 4
      %s46 = int_to_ptr.vmem [resolvable:$true] %s45
      %48 = dma.hbm_to_vmem [thread:$0]  %s2, 64, %s46, [#allocation6]
    $region13: #{discriminator_forward.1} parent=1 // pred_fallthru
      _
    // Predicated region
    $region14: #{discriminator_forward.1} parent=1 // pred_check
      _
    $region15: #{discriminator_forward.1} parent=1 // pred_check_branch
      %50 = sbr.rel (0) target = $region17
    $region16: #{discriminator_forward.1} parent=1 // pred_region
      %s52 = ssub.s32 12288, 12288
      %53 = vsyncadd [#allocation9], %s52
      %s54 = sshll.u32 [#allocation8], 4
      %s55 = int_to_ptr.vmem [resolvable:$true] %s54
      %60 = dma.hbm_to_vmem [thread:$0]  %s3, 12288, %s55, [#allocation9], 192, 192, 12
    $region17: #{discriminator_forward.1} parent=1 // pred_fallthru
      _
    // Predicated region
    $region18: #{discriminator_forward.1} parent=1 // pred_check
      _
    $region19: #{discriminator_forward.1} parent=1 // pred_check_branch
      %62 = sbr.rel (0) target = $region21
    $region20: #{discriminator_forward.1} parent=1 // pred_region
      _
    $region21: #{discriminator_forward.1} parent=1 // pred_fallthru
      _
    // Predicated region
    $region22: #{discriminator_forward.1} parent=1 // pred_check
      _
    $region23: #{discriminator_forward.1} parent=1 // pred_check_branch
      %64 = sbr.rel (0) target = $region25
    $region24: #{discriminator_forward.1} parent=1 // pred_region
      _
    $region25: #{discriminator_forward.1} parent=1 // pred_fallthru
      _
    // Predicated region
    $region26: #{discriminator_forward.1} parent=1 // pred_check
      _
    $region27: #{discriminator_forward.1} parent=1 // pred_check_branch
      %66 = sbr.rel (0) target = $region29
    $region28: #{discriminator_forward.1} parent=1 // pred_region
      _
    $region29: #{discriminator_forward.1} parent=1 // pred_fallthru
      _
    // Predicated region
    $region30: #{discriminator_forward.1} parent=1 // pred_check
      _
    $region31: #{discriminator_forward.1} parent=1 // pred_check_branch
      %68 = sbr.rel (0) target = $region33
    $region32: #{discriminator_forward.1} parent=1 // pred_region
      %69 = dma.done [#allocation4], 128
    $region33: #{discriminator_forward.1} parent=1 // pred_fallthru
      _
    // Predicated region
    $region34: #{discriminator_forward.1} parent=1 // pred_check
      _
    $region35: #{discriminator_forward.1} parent=1 // pred_check_branch
      %71 = sbr.rel (0) target = $region37
    $region36: #{discriminator_forward.1} parent=1 // pred_region
      %72 = dma.done [#allocation6], 768
    $region37: #{discriminator_forward.1} parent=1 // pred_fallthru
      _
    // Predicated region
    $region38: #{discriminator_forward.1} parent=1 // pred_check
      _
    $region39: #{discriminator_forward.1} parent=1 // pred_check_branch
      %74 = sbr.rel (0) target = $region41
    $region40: #{discriminator_forward.1} parent=1 // pred_region
      %75 = dma.done [#allocation6], 64
    $region41: #{discriminator_forward.1} parent=1 // pred_fallthru
      _
    // Predicated region
    $region42: #{discriminator_forward.1} parent=1 // pred_check
      _
    $region43: #{discriminator_forward.1} parent=1 // pred_check_branch
      %77 = sbr.rel (0) target = $region45
    $region44: #{discriminator_forward.1} parent=1 // pred_region
      %78 = dma.done [#allocation9], 12288
    $region45: #{discriminator_forward.1} parent=1 // pred_fallthru
      _
    %v80 = vld [vmem:[#allocation3] sm:$0xff]
    %v81 = vpack.c.bf16 %v80, %v80
    %v82 = vld [vmem:[#allocation5] sm:$0xff]
    %v83 = vld [vmem:[#allocation5 + $0x8] sm:$0xff]
    %v84 = vld [vmem:[#allocation5 + $0x10] sm:$0xff]
    %v85 = vld [vmem:[#allocation5 + $0x18] sm:$0xff]
    %v86 = vld [vmem:[#allocation5 + $0x20] sm:$0xff]
    %v87 = vld [vmem:[#allocation5 + $0x28] sm:$0xff]
    %v88 = vld [vmem:[#allocation7] sm:$0xf]
    %v90 = vlaneseq
    %v91 = vshrl.u32 %v90, 7
    %v92 = vsub.s32 0, %v91
    %v93 = vrot.slane %v88, %v92
    %v94 = vlaneseq
    %v95 = vshrl.u32 %v94, 7
    %v96 = vsub.s32 1, %v95
    %v97 = vrot.slane %v88, %v96
    %v98 = vlaneseq
    %v99 = vshrl.u32 %v98, 7
    %v100 = vsub.s32 2, %v99
    %v101 = vrot.slane %v88, %v100
    %v102 = vlaneseq
    %v103 = vshrl.u32 %v102, 7
    %v104 = vsub.s32 3, %v103
    %v105 = vrot.slane %v88, %v104
    %v116 = vunpack.c.l.b16 %v82
    %v117 = vunpack.c.h.b16 %v82
    %v118 = vunpack.c.l.b16 %v83
    %v119 = vunpack.c.h.b16 %v83
    %v120 = vunpack.c.l.b16 %v84
    %v121 = vunpack.c.h.b16 %v84
    %v122 = vunpack.c.l.b16 %v85
    %v123 = vunpack.c.h.b16 %v85
    %v124 = vunpack.c.l.b16 %v86
    %v125 = vunpack.c.h.b16 %v86
    %v126 = vunpack.c.l.b16 %v87
    %v127 = vunpack.c.h.b16 %v87
    %v128 = vpack.c.b16 %v120, %v116
    %v129 = vpack.c.b16 %v121, %v117
    %v130 = vpack.c.b16 %v122, %v118
    %v131 = vpack.c.b16 %v123, %v119
    %v132 = vpack.c.b16 %v124, %v124
    %v133 = vpack.c.b16 %v125, %v125
    %v134 = vpack.c.b16 %v126, %v126
    %v135 = vpack.c.b16 %v127, %v127
    %vm140 = vcmask 195584
    %v142 = vsel %vm140, %v81, 0
    %vm144 = vcmask 1043456
    %v146 = vsel %vm144, %v132, 0
    %v149 = vsel %vm144, %v133, 0
    %v152 = vsel %vm144, %v134, 0
    %v155 = vsel %vm144, %v135, 0
    %157 = vmatprep.subr.bf16.mxu0 0
    %158 = vmatpush1.bf16.msra.mxu0 0
    %159 = vmatprep.subr.bf16.mxu0 0
    %160 = vmatpush1.bf16.msra.mxu0 0
    %161 = vmatprep.subr.bf16.mxu0 0
    %162 = vmatpush1.bf16.msra.mxu0 0
    %163 = vmatprep.subr.bf16.mxu0 0
    %164 = vmatpush1.bf16.msra.mxu0 0
    %165 = vmatprep.subr.bf16.mxu0 0
    %166 = vmatpush1.bf16.msra.mxu0 0
    %167 = vmatprep.subr.bf16.mxu0 0
    %168 = vmatpush1.bf16.msra.mxu0 0
    %169 = vmatprep.subr.bf16.mxu0 %v149
    %170 = vmatpush1.bf16.msra.mxu0 %v146
    %171 = vmatprep.subr.bf16.mxu0 %v129
    %172 = vmatpush1.bf16.msra.mxu0 %v128
    %173 = vmatprep.subr.bf16.mxu0 0
    %174 = vmatpush2.bf16.msra.mxu0 0
    %175 = vmatprep.subr.bf16.mxu0 0
    %176 = vmatpush2.bf16.msra.mxu0 0
    %177 = vmatprep.subr.bf16.mxu0 0
    %178 = vmatpush2.bf16.msra.mxu0 0
    %179 = vmatprep.subr.bf16.mxu0 0
    %180 = vmatpush2.bf16.msra.mxu0 0
    %181 = vmatprep.subr.bf16.mxu0 0
    %182 = vmatpush2.bf16.msra.mxu0 0
    %183 = vmatprep.subr.bf16.mxu0 0
    %184 = vmatpush2.bf16.msra.mxu0 0
    %185 = vmatprep.subr.bf16.mxu0 0
    %186 = vmatpush2.bf16.msra.mxu0 0
    %187 = vmatprep.subr.bf16.mxu0 0
    %188 = vmatpush2.bf16.msra.mxu0 0
    %189 = vmatprep.mubr.bf16.mxu0 0
    %190 = vmatmul.mubr.bf16.gmra.mxu0 %v142
    %v191 = vpop.f32.mrf.mxu0
    %v192 = vadd.f32 %v93, %v191
    %v193 = vpop.f32.mrf.mxu0
    %v194 = vadd.f32 %v97, %v193
    %v195 = vpop.f32.mrf.mxu0
    %v196 = vpop.f32.mrf.mxu0
    %197 = vdwg.mxu0
    %198 = vmatprep.subr.bf16.mxu0 0
    %199 = vmatpush1.bf16.msra.mxu0 0
    %200 = vmatprep.subr.bf16.mxu0 0
    %201 = vmatpush1.bf16.msra.mxu0 0
    %202 = vmatprep.subr.bf16.mxu0 0
    %203 = vmatpush1.bf16.msra.mxu0 0
    %204 = vmatprep.subr.bf16.mxu0 0
    %205 = vmatpush1.bf16.msra.mxu0 0
    %206 = vmatprep.subr.bf16.mxu0 0
    %207 = vmatpush1.bf16.msra.mxu0 0
    %208 = vmatprep.subr.bf16.mxu0 0
    %209 = vmatpush1.bf16.msra.mxu0 0
    %210 = vmatprep.subr.bf16.mxu0 %v155
    %211 = vmatpush1.bf16.msra.mxu0 %v152
    %212 = vmatprep.subr.bf16.mxu0 %v131
    %213 = vmatpush1.bf16.msra.mxu0 %v130
    %214 = vmatprep.subr.bf16.mxu0 0
    %215 = vmatpush2.bf16.msra.mxu0 0
    %216 = vmatprep.subr.bf16.mxu0 0
    %217 = vmatpush2.bf16.msra.mxu0 0
    %218 = vmatprep.subr.bf16.mxu0 0
    %219 = vmatpush2.bf16.msra.mxu0 0
    %220 = vmatprep.subr.bf16.mxu0 0
    %221 = vmatpush2.bf16.msra.mxu0 0
    %222 = vmatprep.subr.bf16.mxu0 0
    %223 = vmatpush2.bf16.msra.mxu0 0
    %224 = vmatprep.subr.bf16.mxu0 0
    %225 = vmatpush2.bf16.msra.mxu0 0
    %226 = vmatprep.subr.bf16.mxu0 0
    %227 = vmatpush2.bf16.msra.mxu0 0
    %228 = vmatprep.subr.bf16.mxu0 0
    %229 = vmatpush2.bf16.msra.mxu0 0
    %230 = vmatprep.mubr.bf16.mxu0 0
    %231 = vmatmul.mubr.bf16.gmra.mxu0 %v142
    %v232 = vpop.f32.mrf.mxu0
    %v233 = vadd.f32 %v101, %v232
    %v234 = vpop.f32.mrf.mxu0
    %v235 = vadd.f32 %v105, %v234
    %v236 = vpop.f32.mrf.mxu0
    %v237 = vpop.f32.mrf.mxu0
    %238 = vdwg.mxu0
    %v239 = vtanh.pop %v192
    %v240 = vtanh.pop %v194
    %v241 = vtanh.pop %v233
    %v242 = vtanh.pop %v235
    %v243 = vpack.c.bf16 %v239, %v239
    %v244 = vpack.c.bf16 %v240, %v240
    %v245 = vpack.c.bf16 %v241, %v241
    %v246 = vpack.c.bf16 %v242, %v242
    %v247 = vld [vmem:[#allocation8] sm:$0xff]
    %v248 = vld [vmem:[#allocation8 + $0x8] sm:$0xf]
    %v249 = vld [vmem:[#allocation8 + $0xc] sm:$0xff]
    %v250 = vld [vmem:[#allocation8 + $0x14] sm:$0xf]
    %v251 = vld [vmem:[#allocation8 + $0x18] sm:$0xff]
    %v252 = vld [vmem:[#allocation8 + $0x20] sm:$0xf]
    %v253 = vld [vmem:[#allocation8 + $0x24] sm:$0xff]
    %v254 = vld [vmem:[#allocation8 + $0x2c] sm:$0xf]
    %v255 = vld [vmem:[#allocation8 + $0x30] sm:$0xff]
    %v256 = vld [vmem:[#allocation8 + $0x38] sm:$0xf]
    %v257 = vld [vmem:[#allocation8 + $0x3c] sm:$0xff]
    %v258 = vld [vmem:[#allocation8 + $0x44] sm:$0xf]
    %v259 = vld [vmem:[#allocation8 + $0x48] sm:$0xff]
    %v260 = vld [vmem:[#allocation8 + $0x50] sm:$0xf]
    %v261 = vld [vmem:[#allocation8 + $0x54] sm:$0xff]
    %v262 = vld [vmem:[#allocation8 + $0x5c] sm:$0xf]
    %v263 = vld [vmem:[#allocation8 + $0x60] sm:$0xff]
    %v264 = vld [vmem:[#allocation8 + $0x68] sm:$0xf]
    %v265 = vld [vmem:[#allocation8 + $0x6c] sm:$0xff]
    %v266 = vld [vmem:[#allocation8 + $0x74] sm:$0xf]
    %v267 = vld [vmem:[#allocation8 + $0x78] sm:$0xff]
    %v268 = vld [vmem:[#allocation8 + $0x80] sm:$0xf]
    %v269 = vld [vmem:[#allocation8 + $0x84] sm:$0xff]
    %v270 = vld [vmem:[#allocation8 + $0x8c] sm:$0xf]
    %v271 = vld [vmem:[#allocation8 + $0x90] sm:$0xff]
    %v272 = vld [vmem:[#allocation8 + $0x98] sm:$0xf]
    %v273 = vld [vmem:[#allocation8 + $0x9c] sm:$0xff]
    %v274 = vld [vmem:[#allocation8 + $0xa4] sm:$0xf]
    %v275 = vld [vmem:[#allocation8 + $0xa8] sm:$0xff]
    %v276 = vld [vmem:[#allocation8 + $0xb0] sm:$0xf]
    %v277 = vld [vmem:[#allocation8 + $0xb4] sm:$0xff]
    %v278 = vld [vmem:[#allocation8 + $0xbc] sm:$0xf]
    %v279 = vld [vmem:[#allocation8 + $0xc0] sm:$0xff]
    %v280 = vld [vmem:[#allocation8 + $0xc8] sm:$0xf]
    %v281 = vld [vmem:[#allocation8 + $0xcc] sm:$0xff]
    %v282 = vld [vmem:[#allocation8 + $0xd4] sm:$0xf]
    %v283 = vld [vmem:[#allocation8 + $0xd8] sm:$0xff]
    %v284 = vld [vmem:[#allocation8 + $0xe0] sm:$0xf]
    %v285 = vld [vmem:[#allocation8 + $0xe4] sm:$0xff]
    %v286 = vld [vmem:[#allocation8 + $0xec] sm:$0xf]
    %v287 = vld [vmem:[#allocation8 + $0xf0] sm:$0xff]
    %v288 = vld [vmem:[#allocation8 + $0xf8] sm:$0xf]
    %v289 = vld [vmem:[#allocation8 + $0xfc] sm:$0xff]
    %v290 = vld [vmem:[#allocation8 + $0x104] sm:$0xf]
    %v291 = vld [vmem:[#allocation8 + $0x108] sm:$0xff]
    %v292 = vld [vmem:[#allocation8 + $0x110] sm:$0xf]
    %v293 = vld [vmem:[#allocation8 + $0x114] sm:$0xff]
    %v294 = vld [vmem:[#allocation8 + $0x11c] sm:$0xf]
    %v295 = vld [vmem:[#allocation8 + $0x120] sm:$0xff]
    %v296 = vld [vmem:[#allocation8 + $0x128] sm:$0xf]
    %v297 = vld [vmem:[#allocation8 + $0x12c] sm:$0xff]
    %v298 = vld [vmem:[#allocation8 + $0x134] sm:$0xf]
    %v299 = vld [vmem:[#allocation8 + $0x138] sm:$0xff]
    %v300 = vld [vmem:[#allocation8 + $0x140] sm:$0xf]
    %v301 = vld [vmem:[#allocation8 + $0x144] sm:$0xff]
    %v302 = vld [vmem:[#allocation8 + $0x14c] sm:$0xf]
    %v303 = vld [vmem:[#allocation8 + $0x150] sm:$0xff]
    %v304 = vld [vmem:[#allocation8 + $0x158] sm:$0xf]
    %v305 = vld [vmem:[#allocation8 + $0x15c] sm:$0xff]
    %v306 = vld [vmem:[#allocation8 + $0x164] sm:$0xf]
    %v307 = vld [vmem:[#allocation8 + $0x168] sm:$0xff]
    %v308 = vld [vmem:[#allocation8 + $0x170] sm:$0xf]
    %v309 = vld [vmem:[#allocation8 + $0x174] sm:$0xff]
    %v310 = vld [vmem:[#allocation8 + $0x17c] sm:$0xf]
    %v311 = vld [vmem:[#allocation8 + $0x180] sm:$0xff]
    %v312 = vld [vmem:[#allocation8 + $0x188] sm:$0xf]
    %v313 = vld [vmem:[#allocation8 + $0x18c] sm:$0xff]
    %v314 = vld [vmem:[#allocation8 + $0x194] sm:$0xf]
    %v315 = vld [vmem:[#allocation8 + $0x198] sm:$0xff]
    %v316 = vld [vmem:[#allocation8 + $0x1a0] sm:$0xf]
    %v317 = vld [vmem:[#allocation8 + $0x1a4] sm:$0xff]
    %v318 = vld [vmem:[#allocation8 + $0x1ac] sm:$0xf]
    %v319 = vld [vmem:[#allocation8 + $0x1b0] sm:$0xff]
    %v320 = vld [vmem:[#allocation8 + $0x1b8] sm:$0xf]
    %v321 = vld [vmem:[#allocation8 + $0x1bc] sm:$0xff]
    %v322 = vld [vmem:[#allocation8 + $0x1c4] sm:$0xf]
    %v323 = vld [vmem:[#allocation8 + $0x1c8] sm:$0xff]
    %v324 = vld [vmem:[#allocation8 + $0x1d0] sm:$0xf]
    %v325 = vld [vmem:[#allocation8 + $0x1d4] sm:$0xff]
    %v326 = vld [vmem:[#allocation8 + $0x1dc] sm:$0xf]
    %v327 = vld [vmem:[#allocation8 + $0x1e0] sm:$0xff]
    %v328 = vld [vmem:[#allocation8 + $0x1e8] sm:$0xf]
    %v329 = vld [vmem:[#allocation8 + $0x1ec] sm:$0xff]
    %v330 = vld [vmem:[#allocation8 + $0x1f4] sm:$0xf]
    %v331 = vld [vmem:[#allocation8 + $0x1f8] sm:$0xff]
    %v332 = vld [vmem:[#allocation8 + $0x200] sm:$0xf]
    %v333 = vld [vmem:[#allocation8 + $0x204] sm:$0xff]
    %v334 = vld [vmem:[#allocation8 + $0x20c] sm:$0xf]
    %v335 = vld [vmem:[#allocation8 + $0x210] sm:$0xff]
    %v336 = vld [vmem:[#allocation8 + $0x218] sm:$0xf]
    %v337 = vld [vmem:[#allocation8 + $0x21c] sm:$0xff]
    %v338 = vld [vmem:[#allocation8 + $0x224] sm:$0xf]
    %v339 = vld [vmem:[#allocation8 + $0x228] sm:$0xff]
    %v340 = vld [vmem:[#allocation8 + $0x230] sm:$0xf]
    %v341 = vld [vmem:[#allocation8 + $0x234] sm:$0xff]
    %v342 = vld [vmem:[#allocation8 + $0x23c] sm:$0xf]
    %v343 = vld [vmem:[#allocation8 + $0x240] sm:$0xff]
    %v344 = vld [vmem:[#allocation8 + $0x248] sm:$0xf]
    %v345 = vld [vmem:[#allocation8 + $0x24c] sm:$0xff]
    %v346 = vld [vmem:[#allocation8 + $0x254] sm:$0xf]
    %v347 = vld [vmem:[#allocation8 + $0x258] sm:$0xff]
    %v348 = vld [vmem:[#allocation8 + $0x260] sm:$0xf]
    %v349 = vld [vmem:[#allocation8 + $0x264] sm:$0xff]
    %v350 = vld [vmem:[#allocation8 + $0x26c] sm:$0xf]
    %v351 = vld [vmem:[#allocation8 + $0x270] sm:$0xff]
    %v352 = vld [vmem:[#allocation8 + $0x278] sm:$0xf]
    %v353 = vld [vmem:[#allocation8 + $0x27c] sm:$0xff]
    %v354 = vld [vmem:[#allocation8 + $0x284] sm:$0xf]
    %v355 = vld [vmem:[#allocation8 + $0x288] sm:$0xff]
    %v356 = vld [vmem:[#allocation8 + $0x290] sm:$0xf]
    %v357 = vld [vmem:[#allocation8 + $0x294] sm:$0xff]
    %v358 = vld [vmem:[#allocation8 + $0x29c] sm:$0xf]
    %v359 = vld [vmem:[#allocation8 + $0x2a0] sm:$0xff]
    %v360 = vld [vmem:[#allocation8 + $0x2a8] sm:$0xf]
    %v361 = vld [vmem:[#allocation8 + $0x2ac] sm:$0xff]
    %v362 = vld [vmem:[#allocation8 + $0x2b4] sm:$0xf]
    %v363 = vld [vmem:[#allocation8 + $0x2b8] sm:$0xff]
    %v364 = vld [vmem:[#allocation8 + $0x2c0] sm:$0xf]
    %v365 = vld [vmem:[#allocation8 + $0x2c4] sm:$0xff]
    %v366 = vld [vmem:[#allocation8 + $0x2cc] sm:$0xf]
    %v367 = vld [vmem:[#allocation8 + $0x2d0] sm:$0xff]
    %v368 = vld [vmem:[#allocation8 + $0x2d8] sm:$0xf]
    %v369 = vld [vmem:[#allocation8 + $0x2dc] sm:$0xff]
    %v370 = vld [vmem:[#allocation8 + $0x2e4] sm:$0xf]
    %v371 = vld [vmem:[#allocation8 + $0x2e8] sm:$0xff]
    %v372 = vld [vmem:[#allocation8 + $0x2f0] sm:$0xf]
    %v373 = vld [vmem:[#allocation8 + $0x2f4] sm:$0xff]
    %v374 = vld [vmem:[#allocation8 + $0x2fc] sm:$0xf]
    %v375 = vld [vmem:[%s4] sm:$0x7]
    %v377 = vlaneseq
    %v378 = vshrl.u32 %v377, 7
    %v379 = vsub.s32 0, %v378
    %v380 = vrot.slane %v375, %v379
    %v381 = vlaneseq
    %v382 = vshrl.u32 %v381, 7
    %v383 = vsub.s32 1, %v382
    %v384 = vrot.slane %v375, %v383
    %v385 = vlaneseq
    %v386 = vshrl.u32 %v385, 7
    %v387 = vsub.s32 2, %v386
    %v388 = vrot.slane %v375, %v387
    %v520 = vunpack.c.l.b16 %v247
    %v521 = vunpack.c.h.b16 %v247
    %v522 = vunpack.c.l.b16 %v248
    %v523 = vunpack.c.l.b16 %v249
    %v524 = vunpack.c.h.b16 %v249
    %v525 = vunpack.c.l.b16 %v250
    %v526 = vunpack.c.l.b16 %v251
    %v527 = vunpack.c.h.b16 %v251
    %v528 = vunpack.c.l.b16 %v252
    %v529 = vunpack.c.l.b16 %v253
    %v530 = vunpack.c.h.b16 %v253
    %v531 = vunpack.c.l.b16 %v254
    %v532 = vunpack.c.l.b16 %v255
    %v533 = vunpack.c.h.b16 %v255
    %v534 = vunpack.c.l.b16 %v256
    %v535 = vunpack.c.l.b16 %v257
    %v536 = vunpack.c.h.b16 %v257
    %v537 = vunpack.c.l.b16 %v258
    %v538 = vunpack.c.l.b16 %v259
    %v539 = vunpack.c.h.b16 %v259
    %v540 = vunpack.c.l.b16 %v260
    %v541 = vunpack.c.l.b16 %v261
    %v542 = vunpack.c.h.b16 %v261
    %v543 = vunpack.c.l.b16 %v262
    %v544 = vunpack.c.l.b16 %v263
    %v545 = vunpack.c.h.b16 %v263
    %v546 = vunpack.c.l.b16 %v264
    %v547 = vunpack.c.l.b16 %v265
    %v548 = vunpack.c.h.b16 %v265
    %v549 = vunpack.c.l.b16 %v266
    %v550 = vunpack.c.l.b16 %v267
    %v551 = vunpack.c.h.b16 %v267
    %v552 = vunpack.c.l.b16 %v268
    %v553 = vunpack.c.l.b16 %v269
    %v554 = vunpack.c.h.b16 %v269
    %v555 = vunpack.c.l.b16 %v270
    %v556 = vunpack.c.l.b16 %v271
    %v557 = vunpack.c.h.b16 %v271
    %v558 = vunpack.c.l.b16 %v272
    %v559 = vunpack.c.l.b16 %v273
    %v560 = vunpack.c.h.b16 %v273
    %v561 = vunpack.c.l.b16 %v274
    %v562 = vunpack.c.l.b16 %v275
    %v563 = vunpack.c.h.b16 %v275
    %v564 = vunpack.c.l.b16 %v276
    %v565 = vunpack.c.l.b16 %v277
    %v566 = vunpack.c.h.b16 %v277
    %v567 = vunpack.c.l.b16 %v278
    %v568 = vunpack.c.l.b16 %v279
    %v569 = vunpack.c.h.b16 %v279
    %v570 = vunpack.c.l.b16 %v280
    %v571 = vunpack.c.l.b16 %v281
    %v572 = vunpack.c.h.b16 %v281
    %v573 = vunpack.c.l.b16 %v282
    %v574 = vunpack.c.l.b16 %v283
    %v575 = vunpack.c.h.b16 %v283
    %v576 = vunpack.c.l.b16 %v284
    %v577 = vunpack.c.l.b16 %v285
    %v578 = vunpack.c.h.b16 %v285
    %v579 = vunpack.c.l.b16 %v286
    %v580 = vunpack.c.l.b16 %v287
    %v581 = vunpack.c.h.b16 %v287
    %v582 = vunpack.c.l.b16 %v288
    %v583 = vunpack.c.l.b16 %v289
    %v584 = vunpack.c.h.b16 %v289
    %v585 = vunpack.c.l.b16 %v290
    %v586 = vunpack.c.l.b16 %v291
    %v587 = vunpack.c.h.b16 %v291
    %v588 = vunpack.c.l.b16 %v292
    %v589 = vunpack.c.l.b16 %v293
    %v590 = vunpack.c.h.b16 %v293
    %v591 = vunpack.c.l.b16 %v294
    %v592 = vunpack.c.l.b16 %v295
    %v593 = vunpack.c.h.b16 %v295
    %v594 = vunpack.c.l.b16 %v296
    %v595 = vunpack.c.l.b16 %v297
    %v596 = vunpack.c.h.b16 %v297
    %v597 = vunpack.c.l.b16 %v298
    %v598 = vunpack.c.l.b16 %v299
    %v599 = vunpack.c.h.b16 %v299
    %v600 = vunpack.c.l.b16 %v300
    %v601 = vunpack.c.l.b16 %v301
    %v602 = vunpack.c.h.b16 %v301
    %v603 = vunpack.c.l.b16 %v302
    %v604 = vunpack.c.l.b16 %v303
    %v605 = vunpack.c.h.b16 %v303
    %v606 = vunpack.c.l.b16 %v304
    %v607 = vunpack.c.l.b16 %v305
    %v608 = vunpack.c.h.b16 %v305
    %v609 = vunpack.c.l.b16 %v306
    %v610 = vunpack.c.l.b16 %v307
    %v611 = vunpack.c.h.b16 %v307
    %v612 = vunpack.c.l.b16 %v308
    %v613 = vunpack.c.l.b16 %v309
    %v614 = vunpack.c.h.b16 %v309
    %v615 = vunpack.c.l.b16 %v310
    %v616 = vunpack.c.l.b16 %v311
    %v617 = vunpack.c.h.b16 %v311
    %v618 = vunpack.c.l.b16 %v312
    %v619 = vunpack.c.l.b16 %v313
    %v620 = vunpack.c.h.b16 %v313
    %v621 = vunpack.c.l.b16 %v314
    %v622 = vunpack.c.l.b16 %v315
    %v623 = vunpack.c.h.b16 %v315
    %v624 = vunpack.c.l.b16 %v316
    %v625 = vunpack.c.l.b16 %v317
    %v626 = vunpack.c.h.b16 %v317
    %v627 = vunpack.c.l.b16 %v318
    %v628 = vunpack.c.l.b16 %v319
    %v629 = vunpack.c.h.b16 %v319
    %v630 = vunpack.c.l.b16 %v320
    %v631 = vunpack.c.l.b16 %v321
    %v632 = vunpack.c.h.b16 %v321
    %v633 = vunpack.c.l.b16 %v322
    %v634 = vunpack.c.l.b16 %v323
    %v635 = vunpack.c.h.b16 %v323
    %v636 = vunpack.c.l.b16 %v324
    %v637 = vunpack.c.l.b16 %v325
    %v638 = vunpack.c.h.b16 %v325
    %v639 = vunpack.c.l.b16 %v326
    %v640 = vunpack.c.l.b16 %v327
    %v641 = vunpack.c.h.b16 %v327
    %v642 = vunpack.c.l.b16 %v328
    %v643 = vunpack.c.l.b16 %v329
    %v644 = vunpack.c.h.b16 %v329
    %v645 = vunpack.c.l.b16 %v330
    %v646 = vunpack.c.l.b16 %v331
    %v647 = vunpack.c.h.b16 %v331
    %v648 = vunpack.c.l.b16 %v332
    %v649 = vunpack.c.l.b16 %v333
    %v650 = vunpack.c.h.b16 %v333
    %v651 = vunpack.c.l.b16 %v334
    %v652 = vunpack.c.l.b16 %v335
    %v653 = vunpack.c.h.b16 %v335
    %v654 = vunpack.c.l.b16 %v336
    %v655 = vunpack.c.l.b16 %v337
    %v656 = vunpack.c.h.b16 %v337
    %v657 = vunpack.c.l.b16 %v338
    %v658 = vunpack.c.l.b16 %v339
    %v659 = vunpack.c.h.b16 %v339
    %v660 = vunpack.c.l.b16 %v340
    %v661 = vunpack.c.l.b16 %v341
    %v662 = vunpack.c.h.b16 %v341
    %v663 = vunpack.c.l.b16 %v342
    %v664 = vunpack.c.l.b16 %v343
    %v665 = vunpack.c.h.b16 %v343
    %v666 = vunpack.c.l.b16 %v344
    %v667 = vunpack.c.l.b16 %v345
    %v668 = vunpack.c.h.b16 %v345
    %v669 = vunpack.c.l.b16 %v346
    %v670 = vunpack.c.l.b16 %v347
    %v671 = vunpack.c.h.b16 %v347
    %v672 = vunpack.c.l.b16 %v348
    %v673 = vunpack.c.l.b16 %v349
    %v674 = vunpack.c.h.b16 %v349
    %v675 = vunpack.c.l.b16 %v350
    %v676 = vunpack.c.l.b16 %v351
    %v677 = vunpack.c.h.b16 %v351
    %v678 = vunpack.c.l.b16 %v352
    %v679 = vunpack.c.l.b16 %v353
    %v680 = vunpack.c.h.b16 %v353
    %v681 = vunpack.c.l.b16 %v354
    %v682 = vunpack.c.l.b16 %v355
    %v683 = vunpack.c.h.b16 %v355
    %v684 = vunpack.c.l.b16 %v356
    %v685 = vunpack.c.l.b16 %v357
    %v686 = vunpack.c.h.b16 %v357
    %v687 = vunpack.c.l.b16 %v358
    %v688 = vunpack.c.l.b16 %v359
    %v689 = vunpack.c.h.b16 %v359
    %v690 = vunpack.c.l.b16 %v360
    %v691 = vunpack.c.l.b16 %v361
    %v692 = vunpack.c.h.b16 %v361
    %v693 = vunpack.c.l.b16 %v362
    %v694 = vunpack.c.l.b16 %v363
    %v695 = vunpack.c.h.b16 %v363
    %v696 = vunpack.c.l.b16 %v364
    %v697 = vunpack.c.l.b16 %v365
    %v698 = vunpack.c.h.b16 %v365
    %v699 = vunpack.c.l.b16 %v366
    %v700 = vunpack.c.l.b16 %v367
    %v701 = vunpack.c.h.b16 %v367
    %v702 = vunpack.c.l.b16 %v368
    %v703 = vunpack.c.l.b16 %v369
    %v704 = vunpack.c.h.b16 %v369
    %v705 = vunpack.c.l.b16 %v370
    %v706 = vunpack.c.l.b16 %v371
    %v707 = vunpack.c.h.b16 %v371
    %v708 = vunpack.c.l.b16 %v372
    %v709 = vunpack.c.l.b16 %v373
    %v710 = vunpack.c.h.b16 %v373
    %v711 = vunpack.c.l.b16 %v374
    %v712 = vpack.c.b16 %v523, %v520
    %v713 = vpack.c.b16 %v524, %v521
    %v714 = vpack.c.b16 %v525, %v522
    %v715 = vpack.c.b16 %v529, %v526
    %v716 = vpack.c.b16 %v530, %v527
    %v717 = vpack.c.b16 %v531, %v528
    %v718 = vpack.c.b16 %v535, %v532
    %v719 = vpack.c.b16 %v536, %v533
    %v720 = vpack.c.b16 %v537, %v534
    %v721 = vpack.c.b16 %v541, %v538
    %v722 = vpack.c.b16 %v542, %v539
    %v723 = vpack.c.b16 %v543, %v540
    %v724 = vpack.c.b16 %v547, %v544
    %v725 = vpack.c.b16 %v548, %v545
    %v726 = vpack.c.b16 %v549, %v546
    %v727 = vpack.c.b16 %v553, %v550
    %v728 = vpack.c.b16 %v554, %v551
    %v729 = vpack.c.b16 %v555, %v552
    %v730 = vpack.c.b16 %v559, %v556
    %v731 = vpack.c.b16 %v560, %v557
    %v732 = vpack.c.b16 %v561, %v558
    %v733 = vpack.c.b16 %v565, %v562
    %v734 = vpack.c.b16 %v566, %v563
    %v735 = vpack.c.b16 %v567, %v564
    %v736 = vpack.c.b16 %v571, %v568
    %v737 = vpack.c.b16 %v572, %v569
    %v738 = vpack.c.b16 %v573, %v570
    %v739 = vpack.c.b16 %v577, %v574
    %v740 = vpack.c.b16 %v578, %v575
    %v741 = vpack.c.b16 %v579, %v576
    %v742 = vpack.c.b16 %v583, %v580
    %v743 = vpack.c.b16 %v584, %v581
    %v744 = vpack.c.b16 %v585, %v582
    %v745 = vpack.c.b16 %v589, %v586
    %v746 = vpack.c.b16 %v590, %v587
    %v747 = vpack.c.b16 %v591, %v588
    %v748 = vpack.c.b16 %v595, %v592
    %v749 = vpack.c.b16 %v596, %v593
    %v750 = vpack.c.b16 %v597, %v594
    %v751 = vpack.c.b16 %v601, %v598
    %v752 = vpack.c.b16 %v602, %v599
    %v753 = vpack.c.b16 %v603, %v600
    %v754 = vpack.c.b16 %v607, %v604
    %v755 = vpack.c.b16 %v608, %v605
    %v756 = vpack.c.b16 %v609, %v606
    %v757 = vpack.c.b16 %v613, %v610
    %v758 = vpack.c.b16 %v614, %v611
    %v759 = vpack.c.b16 %v615, %v612
    %v760 = vpack.c.b16 %v619, %v616
    %v761 = vpack.c.b16 %v620, %v617
    %v762 = vpack.c.b16 %v621, %v618
    %v763 = vpack.c.b16 %v625, %v622
    %v764 = vpack.c.b16 %v626, %v623
    %v765 = vpack.c.b16 %v627, %v624
    %v766 = vpack.c.b16 %v631, %v628
    %v767 = vpack.c.b16 %v632, %v629
    %v768 = vpack.c.b16 %v633, %v630
    %v769 = vpack.c.b16 %v637, %v634
    %v770 = vpack.c.b16 %v638, %v635
    %v771 = vpack.c.b16 %v639, %v636
    %v772 = vpack.c.b16 %v643, %v640
    %v773 = vpack.c.b16 %v644, %v641
    %v774 = vpack.c.b16 %v645, %v642
    %v775 = vpack.c.b16 %v649, %v646
    %v776 = vpack.c.b16 %v650, %v647
    %v777 = vpack.c.b16 %v651, %v648
    %v778 = vpack.c.b16 %v655, %v652
    %v779 = vpack.c.b16 %v656, %v653
    %v780 = vpack.c.b16 %v657, %v654
    %v781 = vpack.c.b16 %v661, %v658
    %v782 = vpack.c.b16 %v662, %v659
    %v783 = vpack.c.b16 %v663, %v660
    %v784 = vpack.c.b16 %v667, %v664
    %v785 = vpack.c.b16 %v668, %v665
    %v786 = vpack.c.b16 %v669, %v666
    %v787 = vpack.c.b16 %v673, %v670
    %v788 = vpack.c.b16 %v674, %v671
    %v789 = vpack.c.b16 %v675, %v672
    %v790 = vpack.c.b16 %v679, %v676
    %v791 = vpack.c.b16 %v680, %v677
    %v792 = vpack.c.b16 %v681, %v678
    %v793 = vpack.c.b16 %v685, %v682
    %v794 = vpack.c.b16 %v686, %v683
    %v795 = vpack.c.b16 %v687, %v684
    %v796 = vpack.c.b16 %v691, %v688
    %v797 = vpack.c.b16 %v692, %v689
    %v798 = vpack.c.b16 %v693, %v690
    %v799 = vpack.c.b16 %v697, %v694
    %v800 = vpack.c.b16 %v698, %v695
    %v801 = vpack.c.b16 %v699, %v696
    %v802 = vpack.c.b16 %v703, %v700
    %v803 = vpack.c.b16 %v704, %v701
    %v804 = vpack.c.b16 %v705, %v702
    %v805 = vpack.c.b16 %v709, %v706
    %v806 = vpack.c.b16 %v710, %v707
    %v807 = vpack.c.b16 %v711, %v708
    %904 = vmatprep.subr.bf16.mxu0 %v734
    %905 = vmatpush1.bf16.msra.mxu0 %v733
    %906 = vmatprep.subr.bf16.mxu0 %v731
    %907 = vmatpush1.bf16.msra.mxu0 %v730
    %908 = vmatprep.subr.bf16.mxu0 %v728
    %909 = vmatpush1.bf16.msra.mxu0 %v727
    %910 = vmatprep.subr.bf16.mxu0 %v725
    %911 = vmatpush1.bf16.msra.mxu0 %v724
    %912 = vmatprep.subr.bf16.mxu0 %v722
    %913 = vmatpush1.bf16.msra.mxu0 %v721
    %914 = vmatprep.subr.bf16.mxu0 %v719
    %915 = vmatpush1.bf16.msra.mxu0 %v718
    %916 = vmatprep.subr.bf16.mxu0 %v716
    %917 = vmatpush1.bf16.msra.mxu0 %v715
    %918 = vmatprep.subr.bf16.mxu0 %v713
    %919 = vmatpush1.bf16.msra.mxu0 %v712
    %920 = vmatprep.subr.bf16.mxu0 %v758
    %921 = vmatpush2.bf16.msra.mxu0 %v757
    %922 = vmatprep.subr.bf16.mxu0 %v755
    %923 = vmatpush2.bf16.msra.mxu0 %v754
    %924 = vmatprep.subr.bf16.mxu0 %v752
    %925 = vmatpush2.bf16.msra.mxu0 %v751
    %926 = vmatprep.subr.bf16.mxu0 %v749
    %927 = vmatpush2.bf16.msra.mxu0 %v748
    %928 = vmatprep.subr.bf16.mxu0 %v746
    %929 = vmatpush2.bf16.msra.mxu0 %v745
    %930 = vmatprep.subr.bf16.mxu0 %v743
    %931 = vmatpush2.bf16.msra.mxu0 %v742
    %932 = vmatprep.subr.bf16.mxu0 %v740
    %933 = vmatpush2.bf16.msra.mxu0 %v739
    %934 = vmatprep.subr.bf16.mxu0 %v737
    %935 = vmatpush2.bf16.msra.mxu0 %v736
    %936 = vmatprep.mubr.bf16.mxu0 %v244
    %937 = vmatmul.mubr.bf16.gmra.mxu0 %v243
    %v938 = vpop.f32.mrf.mxu0
    %v939 = vadd.f32 %v380, %v938
    %v940 = vpop.f32.mrf.mxu0
    %v941 = vadd.f32 %v384, %v940
    %v942 = vpop.f32.mrf.mxu0
    %v943 = vpop.f32.mrf.mxu0
    %944 = vdwg.mxu0
    %945 = vmatprep.subr.bf16.mxu0 %v782
    %946 = vmatpush1.bf16.msra.mxu0 %v781
    %947 = vmatprep.subr.bf16.mxu0 %v779
    %948 = vmatpush1.bf16.msra.mxu0 %v778
    %949 = vmatprep.subr.bf16.mxu0 %v776
    %950 = vmatpush1.bf16.msra.mxu0 %v775
    %951 = vmatprep.subr.bf16.mxu0 %v773
    %952 = vmatpush1.bf16.msra.mxu0 %v772
    %953 = vmatprep.subr.bf16.mxu0 %v770
    %954 = vmatpush1.bf16.msra.mxu0 %v769
    %955 = vmatprep.subr.bf16.mxu0 %v767
    %956 = vmatpush1.bf16.msra.mxu0 %v766
    %957 = vmatprep.subr.bf16.mxu0 %v764
    %958 = vmatpush1.bf16.msra.mxu0 %v763
    %959 = vmatprep.subr.bf16.mxu0 %v761
    %960 = vmatpush1.bf16.msra.mxu0 %v760
    %961 = vmatprep.subr.bf16.mxu0 %v806
    %962 = vmatpush2.bf16.msra.mxu0 %v805
    %963 = vmatprep.subr.bf16.mxu0 %v803
    %964 = vmatpush2.bf16.msra.mxu0 %v802
    %965 = vmatprep.subr.bf16.mxu0 %v800
    %966 = vmatpush2.bf16.msra.mxu0 %v799
    %967 = vmatprep.subr.bf16.mxu0 %v797
    %968 = vmatpush2.bf16.msra.mxu0 %v796
    %969 = vmatprep.subr.bf16.mxu0 %v794
    %970 = vmatpush2.bf16.msra.mxu0 %v793
    %971 = vmatprep.subr.bf16.mxu0 %v791
    %972 = vmatpush2.bf16.msra.mxu0 %v790
    %973 = vmatprep.subr.bf16.mxu0 %v788
    %974 = vmatpush2.bf16.msra.mxu0 %v787
    %975 = vmatprep.subr.bf16.mxu0 %v785
    %976 = vmatpush2.bf16.msra.mxu0 %v784
    %977 = vmatprep.mubr.bf16.mxu0 %v246
    %978 = vmatmul.mubr.bf16.gmra.mxu0 %v245
    %v979 = vpop.f32.mrf.mxu0
    %v980 = vadd.f32 %v939, %v979
    %v981 = vpop.f32.mrf.mxu0
    %v982 = vadd.f32 %v941, %v981
    %v983 = vpop.f32.mrf.mxu0
    %v984 = vpop.f32.mrf.mxu0
    %985 = vdwg.mxu0
    %986 = vmatprep.subr.bf16.mxu0 0
    %987 = vmatpush1.bf16.msra.mxu0 %v735
    %988 = vmatprep.subr.bf16.mxu0 0
    %989 = vmatpush1.bf16.msra.mxu0 %v732
    %990 = vmatprep.subr.bf16.mxu0 0
    %991 = vmatpush1.bf16.msra.mxu0 %v729
    %992 = vmatprep.subr.bf16.mxu0 0
    %993 = vmatpush1.bf16.msra.mxu0 %v726
    %994 = vmatprep.subr.bf16.mxu0 0
    %995 = vmatpush1.bf16.msra.mxu0 %v723
    %996 = vmatprep.subr.bf16.mxu0 0
    %997 = vmatpush1.bf16.msra.mxu0 %v720
    %998 = vmatprep.subr.bf16.mxu0 0
    %999 = vmatpush1.bf16.msra.mxu0 %v717
    %1000 = vmatprep.subr.bf16.mxu0 0
    %1001 = vmatpush1.bf16.msra.mxu0 %v714
    %1002 = vmatprep.subr.bf16.mxu0 0
    %1003 = vmatpush2.bf16.msra.mxu0 %v759
    %1004 = vmatprep.subr.bf16.mxu0 0
    %1005 = vmatpush2.bf16.msra.mxu0 %v756
    %1006 = vmatprep.subr.bf16.mxu0 0
    %1007 = vmatpush2.bf16.msra.mxu0 %v753
    %1008 = vmatprep.subr.bf16.mxu0 0
    %1009 = vmatpush2.bf16.msra.mxu0 %v750
    %1010 = vmatprep.subr.bf16.mxu0 0
    %1011 = vmatpush2.bf16.msra.mxu0 %v747
    %1012 = vmatprep.subr.bf16.mxu0 0
    %1013 = vmatpush2.bf16.msra.mxu0 %v744
    %1014 = vmatprep.subr.bf16.mxu0 0
    %1015 = vmatpush2.bf16.msra.mxu0 %v741
    %1016 = vmatprep.subr.bf16.mxu0 0
    %1017 = vmatpush2.bf16.msra.mxu0 %v738
    %1018 = vmatprep.mubr.bf16.mxu0 %v244
    %1019 = vmatmul.mubr.bf16.gmra.mxu0 %v243
    %v1020 = vpop.f32.mrf.mxu0
    %v1021 = vadd.f32 %v388, %v1020
    %v1022 = vpop.f32.mrf.mxu0
    %v1023 = vpop.f32.mrf.mxu0
    %v1024 = vpop.f32.mrf.mxu0
    %1025 = vdwg.mxu0
    %1026 = vmatprep.subr.bf16.mxu0 0
    %1027 = vmatpush1.bf16.msra.mxu0 %v783
    %1028 = vmatprep.subr.bf16.mxu0 0
    %1029 = vmatpush1.bf16.msra.mxu0 %v780
    %1030 = vmatprep.subr.bf16.mxu0 0
    %1031 = vmatpush1.bf16.msra.mxu0 %v777
    %1032 = vmatprep.subr.bf16.mxu0 0
    %1033 = vmatpush1.bf16.msra.mxu0 %v774
    %1034 = vmatprep.subr.bf16.mxu0 0
    %1035 = vmatpush1.bf16.msra.mxu0 %v771
    %1036 = vmatprep.subr.bf16.mxu0 0
    %1037 = vmatpush1.bf16.msra.mxu0 %v768
    %1038 = vmatprep.subr.bf16.mxu0 0
    %1039 = vmatpush1.bf16.msra.mxu0 %v765
    %1040 = vmatprep.subr.bf16.mxu0 0
    %1041 = vmatpush1.bf16.msra.mxu0 %v762
    %1042 = vmatprep.subr.bf16.mxu0 0
    %1043 = vmatpush2.bf16.msra.mxu0 %v807
    %1044 = vmatprep.subr.bf16.mxu0 0
    %1045 = vmatpush2.bf16.msra.mxu0 %v804
    %1046 = vmatprep.subr.bf16.mxu0 0
    %1047 = vmatpush2.bf16.msra.mxu0 %v801
    %1048 = vmatprep.subr.bf16.mxu0 0
    %1049 = vmatpush2.bf16.msra.mxu0 %v798
    %1050 = vmatprep.subr.bf16.mxu0 0
    %1051 = vmatpush2.bf16.msra.mxu0 %v795
    %1052 = vmatprep.subr.bf16.mxu0 0
    %1053 = vmatpush2.bf16.msra.mxu0 %v792
    %1054 = vmatprep.subr.bf16.mxu0 0
    %1055 = vmatpush2.bf16.msra.mxu0 %v789
    %1056 = vmatprep.subr.bf16.mxu0 0
    %1057 = vmatpush2.bf16.msra.mxu0 %v786
    %1058 = vmatprep.mubr.bf16.mxu0 %v246
    %1059 = vmatmul.mubr.bf16.gmra.mxu0 %v245
    %v1060 = vpop.f32.mrf.mxu0
    %v1061 = vadd.f32 %v1021, %v1060
    %v1062 = vpop.f32.mrf.mxu0
    %v1063 = vpop.f32.mrf.mxu0
    %v1064 = vpop.f32.mrf.mxu0
    %1065 = vdwg.mxu0
    %v1066 = vtanh.pop %v980
    %v1067 = vtanh.pop %v982
    %v1068 = vtanh.pop %v1061
    %v1069 = vld [vmem:[%s5] sm:$0x7]
    %v1071 = vlaneseq
    %v1072 = vshrl.u32 %v1071, 7
    %v1073 = vsub.s32 0, %v1072
    %v1074 = vrot.slane %v1069, %v1073
    %v1075 = vlaneseq
    %v1076 = vshrl.u32 %v1075, 7
    %v1077 = vsub.s32 1, %v1076
    %v1078 = vrot.slane %v1069, %v1077
    %v1079 = vlaneseq
    %v1080 = vshrl.u32 %v1079, 7
    %v1081 = vsub.s32 2, %v1080
    %v1082 = vrot.slane %v1069, %v1081
    %v1086 = vmul.f32 %v1066, %v1074
    %v1087 = vmul.f32 %v1067, %v1078
    %v1088 = vmul.f32 %v1068, %v1082
    %v1089 = vadd.f32 %v1086, %v1087
    %v1090 = vadd.f32 %v1089, %v1088
    %1091 = vadd.xlane.f32.xlu0 %v1090
    %v1092 = vpop.xlane.xlu0 %1091
    %v1093 = vld [vmem:[#allocation2] sm:$0x1]
    %v1095 = vlaneseq
    %v1096 = vshrl.u32 %v1095, 7
    %v1097 = vsub.s32 0, %v1096
    %v1098 = vrot.slane %v1093, %v1097
    %v1100 = vadd.f32 %v1092, %v1098
    %v1101 = vxor.u32 %v1100, 2147483648
    %v1102 = vmul.f32 %v1101, 1.442695
    %v1103 = vpow.pop %v1102
    %v1104 = vadd.f32 %v1103, 1.0
    %v1105 = vrcp.pop %v1104
    %v1106 = vmul.f32 1.0, %v1105
    %vm1107 = vcmask 7168
    %1108 = vst.msk [vmem:[%s7] sm:$0xff] %vm1107, %v1106
    // Predicated region
    $region46: #{discriminator_forward.1} parent=1 // pred_check
      _
    $region47: #{discriminator_forward.1} parent=1 // pred_check_branch
      %1110 = sbr.rel (0) target = $region49
    $region48: #{discriminator_forward.1} parent=1 // pred_region
      _
    $region49: #{discriminator_forward.1} parent=1 // pred_fallthru
      _
    // Predicated region
    $region50: #{discriminator_forward.1} parent=1 // pred_check
      _
    $region51: #{discriminator_forward.1} parent=1 // pred_check_branch
      %1112 = sbr.rel (0) target = $region53
    $region52: #{discriminator_forward.1} parent=1 // pred_region
      _
    $region53: #{discriminator_forward.1} parent=1 // pred_fallthru
      _
    %1113 = vsyncpa [#allocation4], 1
    %1114 = vsyncpa [#allocation6], 1
    %1115 = vsyncpa [#allocation9], 1

</llo_original>
